<compile_context>
chip_gen: v5e
topology: v5e:2x2
jax: 0.10.0
libtpu: 0.0.40
codegen_flags: <defaults>
</compile_context>

<pallas_src>
import functools

import jax
import jax.numpy as jnp
from jax.experimental import pallas as pl
from jax.experimental.pallas import tpu as pltpu


def _act_kernel(x_ref, o_ref, *, negative_slope):
    x = x_ref[...]
    if negative_slope == 0.0:
        # ReLU: scalar constant avoids materializing a full-tile zeros operand.
        o_ref[...] = jnp.maximum(x, 0)
    else:
        # LeakyReLU with the given negative slope.
        o_ref[...] = jnp.where(x >= 0, x, x * jnp.asarray(negative_slope, x.dtype))


# Sublane granularity by itemsize (sub-32-bit dtypes pack along sublanes).
_SUBLANE_BY_ITEMSIZE = {1: 32, 2: 16, 4: 8, 8: 8}

_LANE_CANDIDATES = (1024, 512, 256, 128)
_TARGET_TILE_BYTES = 8 * 1024 * 1024  # ~8 MiB per block (see design notes)


def _round_up(v, m):
    return ((v + m - 1) // m) * m


def _vmem_physical_bytes():
    """Physical per-core VMEM (64 MiB v7x, 128 MiB v5e/v6e); conservative fallback."""
    try:
        info = pltpu.get_tpu_info()
        cap = getattr(info, "vmem_capacity_bytes", None)
        if cap:
            return int(cap)
    except Exception:
        pass
    return 64 * 1024 * 1024


def act_fun(x, non_lin="relu"):
    """Pallas implementation of ActFun.forward(x)."""
    if non_lin == "relu":
        negative_slope = 0.0
    elif non_lin == "leakyrelu":
        negative_slope = 0.2
    else:
        raise AssertionError(
            "Please specify a activation type from the set {relu,leakyrelu}"
        )

    orig_shape = x.shape
    dtype = x.dtype
    n = x.size
    if n == 0:
        return x

    if negative_slope != 0.0 and not jnp.issubdtype(dtype, jnp.floating):
        # Matches PyTorch: LeakyReLU is not defined for integer dtypes; avoids
        # the slope silently truncating to 0 (which would degenerate to ReLU).
        raise TypeError("leakyrelu requires a floating-point input dtype")

    itemsize = jnp.dtype(dtype).itemsize
    sublane = _SUBLANE_BY_ITEMSIZE.get(itemsize, 8)

    phys_vmem = _vmem_physical_bytes()
    # Keep double-buffered in+out (~4x tile) well under physical VMEM.
    tile_bytes = min(_TARGET_TILE_BYTES, phys_vmem // 6)
    target_elems = max(tile_bytes // itemsize, sublane * 128)

    x_flat = jnp.ravel(x)  # reshape only; no data movement
    needs_slice = False
    n_work = n

    # Zero-copy path: widest lane width that exactly divides n.
    lane = None
    for cand in _LANE_CANDIDATES:
        if n % cand == 0:
            lane = cand
            break

    if lane is None:
        # Ragged element count: pad only to the next multiple of 128 (the only
        # extra copies on this path are this pad and the trailing slice).
        # TODO(synk): if ragged sizes become hot, mask the final block's store
        # instead of padding/slicing to avoid the extra HBM traffic.
        n_work = _round_up(n, 128)
        x_flat = jnp.pad(x_flat, (0, n_work - n))
        needs_slice = True
        lane = 128
        for cand in _LANE_CANDIDATES:
            if n_work % cand == 0:
                lane = cand
                break

    rows = n_work // lane

    # ~8 MiB blocks; block_rows a multiple of the dtype's sublane granularity.
    block_rows = max(sublane, (target_elems // lane) // sublane * sublane)
    # Keep the grid >= 2 steps when possible so "parallel" can feed both
    # TensorCores on v7x (no-op cost elsewhere).
    if rows > sublane:
        block_rows = min(block_rows, _round_up(pl.cdiv(rows, 2), sublane))

    if block_rows >= rows:
        # One block covering the whole slab (full-extent dim is always legal).
        block_rows = rows
        grid = (1,)
    else:
        # cdiv grid; Pallas masks the ragged tail block automatically.
        grid = (pl.cdiv(rows, block_rows),)

    x2d = x_flat.reshape(rows, lane)

    block_bytes = block_rows * lane * itemsize
    vmem_limit = int(min(phys_vmem, max(32 * 1024 * 1024, 5 * block_bytes)))

    kernel = functools.partial(_act_kernel, negative_slope=negative_slope)

    out2d = pl.pallas_call(
        kernel,
        out_shape=jax.ShapeDtypeStruct((rows, lane), dtype),
        grid_spec=pltpu.PrefetchScalarGridSpec(
            num_scalar_prefetch=0,
            grid=grid,
            in_specs=[pl.BlockSpec((block_rows, lane), lambda i: (i, 0))],
            out_specs=pl.BlockSpec((block_rows, lane), lambda i: (i, 0)),
        ),
        compiler_params=pltpu.CompilerParams(
            dimension_semantics=("parallel",),
            vmem_limit_bytes=vmem_limit,
        ),
        cost_estimate=pl.CostEstimate(
            flops=n_work,
            transcendentals=0,
            bytes_accessed=2 * n_work * itemsize,
        ),
    )(x2d)

    out_flat = out2d.reshape(-1)
    if needs_slice:
        out_flat = out_flat[:n]
    return out_flat.reshape(orig_shape)


if __name__ == "__main__":
    key = jax.random.PRNGKey(0)

    # NCHW input matching the module's typical use (batch=2, channels=4, 16x16).
    x = jax.random.normal(key, (2, 4, 16, 16), dtype=jnp.float32)

    # ReLU path
    y_relu = act_fun(x, non_lin="relu")
    jax.block_until_ready(y_relu)
    ref_relu = jnp.maximum(x, 0.0)
    assert y_relu.shape == x.shape and y_relu.dtype == x.dtype
    assert jnp.allclose(y_relu, ref_relu, atol=1e-6), "ReLU mismatch"

    # LeakyReLU path (negative_slope=0.2)
    y_lrelu = act_fun(x, non_lin="leakyrelu")
    jax.block_until_ready(y_lrelu)
    ref_lrelu = jnp.where(x >= 0, x, 0.2 * x)
    assert jnp.allclose(y_lrelu, ref_lrelu, atol=1e-6), "LeakyReLU mismatch"

    # Ragged size (exercises the pad-to-128 + slice fallback path).
    x_ragged = jax.random.normal(jax.random.PRNGKey(1), (3, 5, 7, 11), dtype=jnp.float32)
    y_ragged = act_fun(x_ragged, non_lin="leakyrelu")
    jax.block_until_ready(y_ragged)
    ref_ragged = jnp.where(x_ragged >= 0, x_ragged, 0.2 * x_ragged)
    assert jnp.allclose(y_ragged, ref_ragged, atol=1e-6), "Ragged LeakyReLU mismatch"

    # bf16 input (exercises dtype-dependent sublane handling).
    x_bf16 = jax.random.normal(jax.random.PRNGKey(2), (2, 4, 16, 16), dtype=jnp.bfloat16)
    y_bf16 = act_fun(x_bf16, non_lin="relu")
    jax.block_until_ready(y_bf16)
    assert y_bf16.dtype == jnp.bfloat16
    assert jnp.array_equal(y_bf16, jnp.maximum(x_bf16, 0)), "bf16 ReLU mismatch"

    # Larger slab to exercise the multi-step (>= 2) grid path.
    x_big = jax.random.normal(jax.random.PRNGKey(3), (4, 8, 64, 64), dtype=jnp.float32)
    y_big = act_fun(x_big, non_lin="relu")
    jax.block_until_ready(y_big)
    assert jnp.array_equal(y_big, jnp.maximum(x_big, 0.0)), "Large ReLU mismatch"

    print("KERNEL_OK")
</pallas_src>

<mosaic_0001>
module attributes {stable_mosaic.version = 11 : i64} {
  func.func @_act_kernel(%arg0: i32, %arg1: memref<2x1024xf32, #tpu.memory_space<vmem>>, %arg2: memref<2x1024xf32, #tpu.memory_space<vmem>>) attributes {dimension_semantics = [#tpu.dimension_semantics<parallel>], iteration_bounds = array<i64: 1>, scalar_prefetch = 0 : i64, scratch_operands = 0 : i64, tpu.core_type = #tpu.core_type<tc>, window_params = [{transform_indices = @transform_0, window_bounds = array<i64: 2, 1024>}, {transform_indices = @transform_1, window_bounds = array<i64: 2, 1024>}]} {
    %c0 = arith.constant 0 : index
    %c0_0 = arith.constant 0 : index
    %0 = vector.load %arg1[%c0, %c0_0] : memref<2x1024xf32, #tpu.memory_space<vmem>>, vector<2x1024xf32>
    %cst = arith.constant 0.000000e+00 : f32
    %1 = vector.broadcast %cst : f32 to vector<2x1024xf32>
    %2 = arith.maximumf %0, %1 : vector<2x1024xf32>
    %c0_1 = arith.constant 0 : index
    %c0_2 = arith.constant 0 : index
    %3 = vector.load %arg2[%c0_1, %c0_2] : memref<2x1024xf32, #tpu.memory_space<vmem>>, vector<2x1024xf32>
    tpu.vector_store %arg2[%c0_1, %c0_2], %2 {strides = array<i32>} : memref<2x1024xf32, #tpu.memory_space<vmem>>, vector<2x1024xf32>,
    return
  }
  func.func @transform_0(%arg0: i32) -> (i32, i32) {
    %c0_i32 = arith.constant 0 : i32
    %c0_i32_0 = arith.constant 0 : i32
    return %arg0, %c0_i32 : i32, i32
  }
  func.func @transform_1(%arg0: i32) -> (i32, i32) {
    %c0_i32 = arith.constant 0 : i32
    %c0_i32_0 = arith.constant 0 : i32
    return %arg0, %c0_i32 : i32, i32
  }
}

</mosaic_0001>

<llo_original>
// kernel: tpu_custom_call.1
$region0: #{tpu_custom_call.1}
  #allocation0 [shape = 'u32[]', space=smem, size = 0x4, offset = 0x4, fixed_abs, tag = 'smem constant byte address 0x4 - core index']
  #allocation1 [shape = 'u32[72,128]{1,0:T(1,128)}', space=vmem, size = 0x9000, scoped, tag = 'internal scratch']
  %s0 = inlined_call_operand.hbm [shape: f32[2,1024], index: 0, kind: input, shape index: {}]
  %s1 = inlined_call_operand.hbm [shape: f32[2,1024], index: 1, kind: output, shape index: {}]
  %s2 = sld [smem:[#allocation0]]
  $region18: #{tpu_custom_call.1} parent=0
    _
  %s4 = ssub.s32 1, %s2
  %s5 = scalar_select 0, %s4, %s2
  $region1: #{tpu_custom_call.1} parent=0
    #allocation2 [shape = 'u8[8192]{0}', space=vmem, size = 0x2000, scoped, tag = 'input window, operand 0, single buffered']
    #allocation3 [shape = 's32[1]{0}', space=sflag, size = 0x4, scoped, tag = 'scoped memory for tpu_custom_call.1']
    #allocation4 [shape = 's32[1]{0}', space=sflag, size = 0x4, scoped, tag = 'scoped memory for tpu_custom_call.1']
    #allocation5 [shape = 'u8[8192]{0}', space=vmem, size = 0x2000, scoped, tag = 'output window, operand 0, single buffered']
    %6 = vsyncpa [#allocation3], 0
    %7 = vsyncpa [#allocation4], 0
    // Predicated region
    $region2: #{tpu_custom_call.1} parent=1 // pred_check
      _
    $region3: #{tpu_custom_call.1} parent=1 // pred_check_branch
      %9 = sbr.rel (0) target = $region5
    $region4: #{tpu_custom_call.1} parent=1 // pred_region
      %11 = vsyncadd [#allocation3], 0
      %s13 = sshll.u32 %s0, 4
      %s14 = int_to_ptr.hbm [resolvable:$true] %s13
      %s15 = sshll.u32 [#allocation2], 4
      %s16 = int_to_ptr.vmem [resolvable:$true] %s15
      %18 = dma.hbm_to_vmem [thread:$0]  %s14, 256, %s16, [#allocation3]
    $region5: #{tpu_custom_call.1} parent=1 // pred_fallthru
      _
    // Predicated region
    $region6: #{tpu_custom_call.1} parent=1 // pred_check
      _
    $region7: #{tpu_custom_call.1} parent=1 // pred_check_branch
      %20 = sbr.rel (0) target = $region9
    $region8: #{tpu_custom_call.1} parent=1 // pred_region
      %22 = dma.done [#allocation3], 256
    $region9: #{tpu_custom_call.1} parent=1 // pred_fallthru
      _
    %v23 = vld [vmem:[#allocation2] sm:$0xff]
    %v24 = vld [vmem:[#allocation2 + $0x8] sm:$0xff]
    %v25 = vmax.f32 %v23, 0.0
    %v26 = vmax.f32 %v24, 0.0
    %27 = vst [vmem:[#allocation5] sm:$0xff] %v25
    %28 = vst [vmem:[#allocation5 + $0x8] sm:$0xff] %v26
    // Predicated region
    $region10: #{tpu_custom_call.1} parent=1 // pred_check
      _
    $region11: #{tpu_custom_call.1} parent=1 // pred_check_branch
      %30 = sbr.rel (0) target = $region13
    $region12: #{tpu_custom_call.1} parent=1 // pred_region
      %32 = vsyncadd [#allocation4], 0
      %s34 = sshll.u32 [#allocation5], 4
      %s35 = int_to_ptr.vmem [resolvable:$true] %s34
      %s36 = sshll.u32 %s1, 4
      %s37 = int_to_ptr.hbm [resolvable:$true] %s36
      %39 = dma.vmem_to_hbm [thread:$0]  %s35, 256, %s37, [#allocation4]
    $region13: #{tpu_custom_call.1} parent=1 // pred_fallthru
      _
    // Predicated region
    $region14: #{tpu_custom_call.1} parent=1 // pred_check
      _
    $region15: #{tpu_custom_call.1} parent=1 // pred_check_branch
      %41 = sbr.rel (0) target = $region17
    $region16: #{tpu_custom_call.1} parent=1 // pred_region
      %43 = dma.done [#allocation4], 256
    $region17: #{tpu_custom_call.1} parent=1 // pred_fallthru
      _
    %44 = vsyncpa [#allocation3], 1
    %45 = vsyncpa [#allocation4], 1

</llo_original>
